<compile_context>
chip_gen: v5e
topology: v5e:2x2
jax: 0.10.0
libtpu: 0.0.40
codegen_flags: <defaults>
</compile_context>

<pallas_src>
import jax
import jax.numpy as jnp
from jax.experimental import pallas as pl
from jax.experimental.pallas import tpu as pltpu


# ----------------------------------------------------------------------------
# Glue: SO(3) exponential map (Rodrigues), heads x 3 -> heads x 3 x 3
# ----------------------------------------------------------------------------
def so3_exponential_map(log_rot: jax.Array, eps: float = 1e-4) -> jax.Array:
    nrms = jnp.sum(log_rot * log_rot, axis=-1)
    theta = jnp.sqrt(jnp.clip(nrms, eps))
    fac1 = jnp.sin(theta) / theta
    fac2 = (1.0 - jnp.cos(theta)) / (theta * theta)
    x, y, z = log_rot[:, 0], log_rot[:, 1], log_rot[:, 2]
    zeros = jnp.zeros_like(x)
    # hat(v) = [[0,-z,y],[z,0,-x],[-y,x,0]]
    K = jnp.stack(
        [zeros, -z, y,
         z, zeros, -x,
         -y, x, zeros], axis=-1).reshape(-1, 3, 3)
    KK = jnp.einsum('hij,hjk->hik', K, K)
    eye = jnp.eye(3, dtype=log_rot.dtype)[None]
    return fac1[:, None, None] * K + fac2[:, None, None] * KK + eye


# ----------------------------------------------------------------------------
# Pallas kernel: per (batch, head, row-tile) block
#   in:  pcd tile  (1, 1, 3, ts, 128)
#   out: same-shape tile (1, 1, 3, ts, 128)
# tab_ref (H, 12) in SMEM: [0:9]  = (R * scale) flattened with index c*3 + n,
#                          [9:12] = bias[n] = sum_c (R*scale)[c,n] * shift[c]
# ----------------------------------------------------------------------------
def _vol_kernel(tab_ref, pcd_ref, out_ref):
    h = pl.program_id(1)

    # Hoist all 12 SMEM scalars into locals once per grid step.
    t0 = tab_ref[h, 0]
    t1 = tab_ref[h, 1]
    t2 = tab_ref[h, 2]
    t3 = tab_ref[h, 3]
    t4 = tab_ref[h, 4]
    t5 = tab_ref[h, 5]
    t6 = tab_ref[h, 6]
    t7 = tab_ref[h, 7]
    t8 = tab_ref[h, 8]
    b0 = tab_ref[h, 9]
    b1 = tab_ref[h, 10]
    b2 = tab_ref[h, 11]

    x0 = pcd_ref[0, 0, 0]                                  # (ts, 128) f32, full vregs
    x1 = pcd_ref[0, 0, 1]
    x2 = pcd_ref[0, 0, 2]

    # out[n] = bias[n] + Rp[0,n]*x0 + Rp[1,n]*x1 + Rp[2,n]*x2
    # Direct per-channel stores (no jnp.stack temporary).
    out_ref[0, 0, 0] = b0 + t0 * x0 + t3 * x1 + t6 * x2
    out_ref[0, 0, 1] = b1 + t1 * x0 + t4 * x1 + t7 * x2
    out_ref[0, 0, 2] = b2 + t2 * x0 + t5 * x1 + t8 * x2


def _round_up(x: int, m: int) -> int:
    return ((x + m - 1) // m) * m


def _pick_tile_rows(rows: int, n_outer_blocks: int, max_rows: int = 2048) -> int:
    """Row-tile size: full dim for small inputs, otherwise a multiple of 8 (<= max_rows).

    The grid uses pl.cdiv(rows, ts) so ts does not need to divide rows; Pallas masks
    the ragged last block.  If the whole grid would otherwise be a single block, split
    the rows so v7x's two TensorCores both get work.
    """
    if rows <= max_rows:
        ts = rows                      # full-extent dim: always (8,128)-legal
    else:
        ts = max_rows                  # multiple of 8; ragged tail handled by Pallas
    if n_outer_blocks * ((rows + ts - 1) // ts) < 2 and rows >= 16:
        ts = _round_up((rows + 1) // 2, 8)
    return ts


def vol_transformer_forward(pcd, log_R, shift, scales=None, *, max_tile_rows: int = 2048):
    """pcd: (B, H, 3, P) f32. Returns (B, H, 3, P) f32."""
    B, H, C, P = pcd.shape
    assert C == 3, "VolTransformer expects 3 input channels"
    assert P % 128 == 0, "point count must be a multiple of 128"
    rows = P // 128
    ts = _pick_tile_rows(rows, B * H, max_tile_rows)

    # Fold shift and (optional) scales into the rotation.
    R = so3_exponential_map(log_R)                          # (H, 3, 3), R[h, c, n]
    scale = scales if scales is not None else jnp.ones((H, 3), dtype=pcd.dtype)
    Rp = R * scale[:, None, :]                              # (H, 3, 3)
    bias = jnp.einsum('hcn,hc->hn', Rp, shift)              # (H, 3)
    table = jnp.concatenate([Rp.reshape(H, 9), bias], axis=-1).astype(pcd.dtype)  # (H, 12)

    # Free repack of the point axis into (rows, 128) for full (8,128) vreg occupancy.
    pcd_r = pcd.reshape(B, H, 3, rows, 128)
    grid = (B, H, pl.cdiv(rows, ts))

    out = pl.pallas_call(
        _vol_kernel,
        out_shape=jax.ShapeDtypeStruct((B, H, 3, rows, 128), pcd.dtype),
        grid_spec=pltpu.PrefetchScalarGridSpec(
            num_scalar_prefetch=1,                          # packed (H, 12) table -> SMEM
            grid=grid,
            in_specs=[
                pl.BlockSpec((1, 1, 3, ts, 128), lambda b, h, p, *_: (b, h, 0, p, 0)),
            ],
            out_specs=pl.BlockSpec((1, 1, 3, ts, 128), lambda b, h, p, *_: (b, h, 0, p, 0)),
        ),
        compiler_params=pltpu.CompilerParams(
            dimension_semantics=("parallel", "parallel", "parallel"),
            # ~12 MiB double-buffered working set at ts=2048; raise v5e's 16 MiB
            # scoped default, still within v7x's 64 MiB physical VMEM.
            vmem_limit_bytes=32 * 1024 * 1024,
        ),
        cost_estimate=pl.CostEstimate(
            flops=18 * B * H * P,
            transcendentals=0,
            bytes_accessed=2 * B * H * 3 * P * 4,
        ),
    )(table, pcd_r)

    return out.reshape(B, H, 3, P)


# ----------------------------------------------------------------------------
# Pure-JAX reference (mirrors the PyTorch forward exactly)
# ----------------------------------------------------------------------------
def vol_transformer_ref(pcd, log_R, shift, scales=None):
    R = so3_exponential_map(log_R)
    x = pcd + shift[None, :, :, None]
    x = jnp.einsum('bhcp,hcn->bhnp', x, R)
    if scales is not None:
        x = x * scales[None, :, :, None]
    return x


if __name__ == "__main__":
    key = jax.random.PRNGKey(0)
    k1, k2, k3, k4 = jax.random.split(key, 4)

    B, HEADS, P = 2, 4, 256

    # Parameter shapes follow the module __init__: log_R (H,3), shift (H,3), scales (H,3).
    # (shift/scales are given small random deterministic values so the test is non-trivial;
    #  the module initializes them to zeros / ones.)
    log_R = jax.random.normal(k1, (HEADS, 3), dtype=jnp.float32)
    shift = 0.1 * jax.random.normal(k2, (HEADS, 3), dtype=jnp.float32)
    scales = 1.0 + 0.1 * jax.random.normal(k3, (HEADS, 3), dtype=jnp.float32)

    pcd = jax.random.normal(k4, (B, HEADS, 3, P), dtype=jnp.float32)

    ok = True
    for sc in (None, scales):  # covers scales=False and scales=True paths
        out = vol_transformer_forward(pcd, log_R, shift, sc)
        out = jax.block_until_ready(out)
        ref = vol_transformer_ref(pcd, log_R, shift, sc)
        ok = ok and bool(jnp.allclose(out, ref, rtol=1e-5, atol=1e-5))
        assert out.shape == (B, HEADS, 3, P)

    if ok:
        print("KERNEL_OK")
    else:
        print("MISMATCH")
</pallas_src>

<mosaic_0001>
module attributes {stable_mosaic.version = 11 : i64} {
  func.func @_vol_kernel(%arg0: i32, %arg1: i32, %arg2: i32, %arg3: memref<4x12xf32, #tpu.memory_space<smem>>, %arg4: memref<1x1x3x2x128xf32, #tpu.memory_space<vmem>>, %arg5: memref<1x1x3x2x128xf32, #tpu.memory_space<vmem>>) attributes {dimension_semantics = [#tpu.dimension_semantics<parallel>, #tpu.dimension_semantics<parallel>, #tpu.dimension_semantics<parallel>], iteration_bounds = array<i64: 2, 4, 1>, scalar_prefetch = 1 : i64, scratch_operands = 0 : i64, tpu.core_type = #tpu.core_type<tc>, window_params = [{transform_indices = @transform_0, window_bounds = array<i64: 1, 1, 3, 2, 128>}, {transform_indices = @transform_1, window_bounds = array<i64: 1, 1, 3, 2, 128>}]} {
    %0 = arith.index_cast %arg1 : i32 to index
    %c0 = arith.constant 0 : index
    %1 = memref.load %arg3[%0, %c0] : memref<4x12xf32, #tpu.memory_space<smem>>
    %2 = arith.index_cast %arg1 : i32 to index
    %c1 = arith.constant 1 : index
    %3 = memref.load %arg3[%2, %c1] : memref<4x12xf32, #tpu.memory_space<smem>>
    %4 = arith.index_cast %arg1 : i32 to index
    %c2 = arith.constant 2 : index
    %5 = memref.load %arg3[%4, %c2] : memref<4x12xf32, #tpu.memory_space<smem>>
    %6 = arith.index_cast %arg1 : i32 to index
    %c3 = arith.constant 3 : index
    %7 = memref.load %arg3[%6, %c3] : memref<4x12xf32, #tpu.memory_space<smem>>
    %8 = arith.index_cast %arg1 : i32 to index
    %c4 = arith.constant 4 : index
    %9 = memref.load %arg3[%8, %c4] : memref<4x12xf32, #tpu.memory_space<smem>>
    %10 = arith.index_cast %arg1 : i32 to index
    %c5 = arith.constant 5 : index
    %11 = memref.load %arg3[%10, %c5] : memref<4x12xf32, #tpu.memory_space<smem>>
    %12 = arith.index_cast %arg1 : i32 to index
    %c6 = arith.constant 6 : index
    %13 = memref.load %arg3[%12, %c6] : memref<4x12xf32, #tpu.memory_space<smem>>
    %14 = arith.index_cast %arg1 : i32 to index
    %c7 = arith.constant 7 : index
    %15 = memref.load %arg3[%14, %c7] : memref<4x12xf32, #tpu.memory_space<smem>>
    %16 = arith.index_cast %arg1 : i32 to index
    %c8 = arith.constant 8 : index
    %17 = memref.load %arg3[%16, %c8] : memref<4x12xf32, #tpu.memory_space<smem>>
    %18 = arith.index_cast %arg1 : i32 to index
    %c9 = arith.constant 9 : index
    %19 = memref.load %arg3[%18, %c9] : memref<4x12xf32, #tpu.memory_space<smem>>
    %20 = arith.index_cast %arg1 : i32 to index
    %c10 = arith.constant 10 : index
    %21 = memref.load %arg3[%20, %c10] : memref<4x12xf32, #tpu.memory_space<smem>>
    %22 = arith.index_cast %arg1 : i32 to index
    %c11 = arith.constant 11 : index
    %23 = memref.load %arg3[%22, %c11] : memref<4x12xf32, #tpu.memory_space<smem>>
    %c0_0 = arith.constant 0 : index
    %c0_1 = arith.constant 0 : index
    %c0_2 = arith.constant 0 : index
    %c0_3 = arith.constant 0 : index
    %c0_4 = arith.constant 0 : index
    %24 = vector.load %arg4[%c0_0, %c0_1, %c0_2, %c0_3, %c0_4] : memref<1x1x3x2x128xf32, #tpu.memory_space<vmem>>, vector<1x1x1x2x128xf32>
    %25 = vector.shape_cast %24 : vector<1x1x1x2x128xf32> to vector<2x128xf32>
    %c0_5 = arith.constant 0 : index
    %c0_6 = arith.constant 0 : index
    %c1_7 = arith.constant 1 : index
    %c0_8 = arith.constant 0 : index
    %c0_9 = arith.constant 0 : index
    %26 = vector.load %arg4[%c0_5, %c0_6, %c1_7, %c0_8, %c0_9] : memref<1x1x3x2x128xf32, #tpu.memory_space<vmem>>, vector<1x1x1x2x128xf32>
    %27 = vector.shape_cast %26 : vector<1x1x1x2x128xf32> to vector<2x128xf32>
    %c0_10 = arith.constant 0 : index
    %c0_11 = arith.constant 0 : index
    %c2_12 = arith.constant 2 : index
    %c0_13 = arith.constant 0 : index
    %c0_14 = arith.constant 0 : index
    %28 = vector.load %arg4[%c0_10, %c0_11, %c2_12, %c0_13, %c0_14] : memref<1x1x3x2x128xf32, #tpu.memory_space<vmem>>, vector<1x1x1x2x128xf32>
    %29 = vector.shape_cast %28 : vector<1x1x1x2x128xf32> to vector<2x128xf32>
    %30 = vector.broadcast %1 : f32 to vector<2x128xf32>
    %31 = arith.mulf %30, %25 : vector<2x128xf32>
    %32 = vector.broadcast %19 : f32 to vector<2x128xf32>
    %33 = arith.addf %32, %31 : vector<2x128xf32>
    %34 = vector.broadcast %7 : f32 to vector<2x128xf32>
    %35 = arith.mulf %34, %27 : vector<2x128xf32>
    %36 = arith.addf %33, %35 : vector<2x128xf32>
    %37 = vector.broadcast %13 : f32 to vector<2x128xf32>
    %38 = arith.mulf %37, %29 : vector<2x128xf32>
    %39 = arith.addf %36, %38 : vector<2x128xf32>
    %c0_15 = arith.constant 0 : index
    %c0_16 = arith.constant 0 : index
    %c0_17 = arith.constant 0 : index
    %c0_18 = arith.constant 0 : index
    %c0_19 = arith.constant 0 : index
    %40 = vector.load %arg5[%c0_15, %c0_16, %c0_17, %c0_18, %c0_19] : memref<1x1x3x2x128xf32, #tpu.memory_space<vmem>>, vector<1x1x1x2x128xf32>
    %41 = vector.shape_cast %40 : vector<1x1x1x2x128xf32> to vector<2x128xf32>
    %42 = vector.shape_cast %39 : vector<2x128xf32> to vector<1x1x1x2x128xf32>
    tpu.vector_store %arg5[%c0_15, %c0_16, %c0_17, %c0_18, %c0_19], %42 {strides = array<i32>} : memref<1x1x3x2x128xf32, #tpu.memory_space<vmem>>, vector<1x1x1x2x128xf32>,
    %43 = vector.broadcast %3 : f32 to vector<2x128xf32>
    %44 = arith.mulf %43, %25 : vector<2x128xf32>
    %45 = vector.broadcast %21 : f32 to vector<2x128xf32>
    %46 = arith.addf %45, %44 : vector<2x128xf32>
    %47 = vector.broadcast %9 : f32 to vector<2x128xf32>
    %48 = arith.mulf %47, %27 : vector<2x128xf32>
    %49 = arith.addf %46, %48 : vector<2x128xf32>
    %50 = vector.broadcast %15 : f32 to vector<2x128xf32>
    %51 = arith.mulf %50, %29 : vector<2x128xf32>
    %52 = arith.addf %49, %51 : vector<2x128xf32>
    %c0_20 = arith.constant 0 : index
    %c0_21 = arith.constant 0 : index
    %c1_22 = arith.constant 1 : index
    %c0_23 = arith.constant 0 : index
    %c0_24 = arith.constant 0 : index
    %53 = vector.load %arg5[%c0_20, %c0_21, %c1_22, %c0_23, %c0_24] : memref<1x1x3x2x128xf32, #tpu.memory_space<vmem>>, vector<1x1x1x2x128xf32>
    %54 = vector.shape_cast %53 : vector<1x1x1x2x128xf32> to vector<2x128xf32>
    %55 = vector.shape_cast %52 : vector<2x128xf32> to vector<1x1x1x2x128xf32>
    tpu.vector_store %arg5[%c0_20, %c0_21, %c1_22, %c0_23, %c0_24], %55 {strides = array<i32>} : memref<1x1x3x2x128xf32, #tpu.memory_space<vmem>>, vector<1x1x1x2x128xf32>,
    %56 = vector.broadcast %5 : f32 to vector<2x128xf32>
    %57 = arith.mulf %56, %25 : vector<2x128xf32>
    %58 = vector.broadcast %23 : f32 to vector<2x128xf32>
    %59 = arith.addf %58, %57 : vector<2x128xf32>
    %60 = vector.broadcast %11 : f32 to vector<2x128xf32>
    %61 = arith.mulf %60, %27 : vector<2x128xf32>
    %62 = arith.addf %59, %61 : vector<2x128xf32>
    %63 = vector.broadcast %17 : f32 to vector<2x128xf32>
    %64 = arith.mulf %63, %29 : vector<2x128xf32>
    %65 = arith.addf %62, %64 : vector<2x128xf32>
    %c0_25 = arith.constant 0 : index
    %c0_26 = arith.constant 0 : index
    %c2_27 = arith.constant 2 : index
    %c0_28 = arith.constant 0 : index
    %c0_29 = arith.constant 0 : index
    %66 = vector.load %arg5[%c0_25, %c0_26, %c2_27, %c0_28, %c0_29] : memref<1x1x3x2x128xf32, #tpu.memory_space<vmem>>, vector<1x1x1x2x128xf32>
    %67 = vector.shape_cast %66 : vector<1x1x1x2x128xf32> to vector<2x128xf32>
    %68 = vector.shape_cast %65 : vector<2x128xf32> to vector<1x1x1x2x128xf32>
    tpu.vector_store %arg5[%c0_25, %c0_26, %c2_27, %c0_28, %c0_29], %68 {strides = array<i32>} : memref<1x1x3x2x128xf32, #tpu.memory_space<vmem>>, vector<1x1x1x2x128xf32>,
    return
  }
  func.func @transform_0(%arg0: i32, %arg1: i32, %arg2: i32, %arg3: memref<4x12xf32, #tpu.memory_space<smem>>) -> (i32, i32, i32, i32, i32) {
    %c0_i32 = arith.constant 0 : i32
    %c0_i32_0 = arith.constant 0 : i32
    %c0_i32_1 = arith.constant 0 : i32
    return %arg0, %arg1, %c0_i32, %arg2, %c0_i32_0 : i32, i32, i32, i32, i32
  }
  func.func @transform_1(%arg0: i32, %arg1: i32, %arg2: i32, %arg3: memref<4x12xf32, #tpu.memory_space<smem>>) -> (i32, i32, i32, i32, i32) {
    %c0_i32 = arith.constant 0 : i32
    %c0_i32_0 = arith.constant 0 : i32
    %c0_i32_1 = arith.constant 0 : i32
    return %arg0, %arg1, %c0_i32, %arg2, %c0_i32_0 : i32, i32, i32, i32, i32
  }
}

</mosaic_0001>

<llo_original>
// kernel: tpu_custom_call.1
$region0: #{tpu_custom_call.1}
  #allocation0 [shape = 'u32[]', space=smem, size = 0x4, offset = 0x4, fixed_abs, tag = 'smem constant byte address 0x4 - core index']
  #allocation1 [shape = 'u32[72,128]{1,0:T(1,128)}', space=vmem, size = 0x9000, scoped, tag = 'internal scratch']
  #allocation2 [shape = 's32[1]{0}', space=sflag, size = 0x4, scoped, tag = 'scoped memory for tpu_custom_call.1']
  #allocation3 [shape = 'u8[2048]{0}', space=smem, size = 0x800, scoped, tag = 'prefetched SMEM operand 0']
  %s0 = inlined_call_operand.hbm [shape: f32[4,12], index: 0, kind: input, shape index: {}]
  %s1 = inlined_call_operand.hbm [shape: f32[2,4,3,2,128], index: 1, kind: input, shape index: {}]
  %s2 = inlined_call_operand.hbm [shape: f32[2,4,3,2,128], index: 2, kind: output, shape index: {}]
  %s3 = sld [smem:[#allocation0]]
  $region41: #{tpu_custom_call.1} parent=0
    _
  %s5 = ssub.s32 1, %s3
  %s6 = scalar_select 0, %s5, %s3
  %s8 = sshll.u32 %s0, 4
  %s9 = int_to_ptr.hbm [resolvable:$true] %s8
  %11 = dma.hbm_to_smem %s9, 64, [#allocation3], [#allocation2]
  %13 = dma.done [#allocation2], 64
  %14 = sfence
  $region1: #{tpu_custom_call.1} parent=0
    #allocation4 [shape = 'u8[6144]{0}', space=vmem, size = 0x1800, scoped, tag = 'input window, operand 1']
    #allocation5 [shape = 's32[2]{0}', space=sflag, size = 0x8, scoped, tag = 'scoped memory for tpu_custom_call.1']
    #allocation6 [shape = 's32[2]{0}', space=sflag, size = 0x8, scoped, tag = 'scoped memory for tpu_custom_call.1']
    #allocation7 [shape = 'u8[6144]{0}', space=vmem, size = 0x1800, scoped, tag = 'output window, operand 0']
    %15 = vsyncpa [#allocation5], 0
    %s16 = scalar_lea.sflag [#allocation5], 1
    %17 = vsyncpa %s16, 0
    %18 = vsyncpa [#allocation6], 0
    %s19 = scalar_lea.sflag [#allocation6], 1
    %20 = vsyncpa %s19, 0
    loop: start=0, step=1, limit=10
    $region2: #{tpu_custom_call.1} parent=1 // loop_pre_header
      _
    $region3: #{tpu_custom_call.1} parent=1 // loop_header
      %s22 = sphi 0, %s26
      %p23 = scmp.ge.s32.totalorder %s22, 10
      %s29 = sphi 0, %s48
      %s30 = sphi 0, %s44
      %s31 = sphi 0, %s40
      %s32 = sphi 0, %s29
      %s33 = sphi 0, %s30
      %s34 = sphi 0, %s31
      %s35 = sphi 0, %s32
      %s36 = sphi 0, %s33
      %s37 = sphi 0, %s34
      %s55 = sphi 0, %s57
      %s58 = sphi 0, %s55
      %s59 = sphi 0, %s58
      %s75 = sphi 0, %s59
      %s85 = sphi 0, %s87
      %s88 = sphi 0, %s85
      %s89 = sphi 0, %s88
      %s105 = sphi 0, %s89
    $region4: #{tpu_custom_call.1} parent=1 // loop_header_branch
      %25 = sbr.rel (%p23) target = $region8
    $region5: #{tpu_custom_call.1} parent=1 // loop_body
      %s27 = ssub.s32 %s22, 1
      %s28 = ssub.s32 %s22, 2
      %s38 = sadd.s32 1, %s31
      %p39 = scmp.ge.s32.totalorder %s38, 1
      %s40 = scalar_select %p39, 0, %s38
      %s41 = sadd.s32 1, %s30
      %s42 = scalar_select %p39, %s41, %s30
      %p43 = scmp.ge.s32.totalorder %s42, 4
      %s44 = scalar_select %p43, 0, %s42
      %s45 = sadd.s32 1, %s29
      %s46 = scalar_select %p43, %s45, %s29
      %p47 = scmp.ge.s32.totalorder %s46, 2
      %s48 = scalar_select %p47, 0, %s46
      %s49 = ssub.s32 %s29, %s48
      %s50 = ssub.s32 %s30, %s44
      %s51 = sor.u32 %s49, %s50
      %s52 = ssub.s32 %s31, %s40
      %s53 = sor.u32 %s51, %s52
      %p54 = scmp.eq.s32.totalorder %s53, 0
      %s56 = sadd.s32 %s55, 1
      %s57 = scalar_select %p54, %s55, %s56
      %p60 = pneg %p54
      %p61 = scmp.eq.s32.totalorder %s22, 7
      %p62 = por %p60, %p61
      %p63 = scmp.ne.s32.totalorder %s55, %s58
      %p64 = scmp.eq.s32.totalorder %s22, 0
      %p65 = por %p63, %p64
      %p66 = scmp.ne.s32.totalorder %s55, %s58
      %p67 = scmp.eq.s32.totalorder %s27, 7
      %p68 = por %p66, %p67
      %p69 = scmp.ne.s32.totalorder %s58, %s59
      %p70 = scmp.eq.s32.totalorder %s27, 0
      %p71 = por %p69, %p70
      %p72 = scmp.ne.s32.totalorder %s58, %s59
      %p73 = scmp.eq.s32.totalorder %s28, 7
      %p74 = por %p72, %p73
      %p76 = scmp.ne.s32.totalorder %s59, %s75
      %p77 = scmp.eq.s32.totalorder %s28, 0
      %p78 = por %p76, %p77
      %s79 = ssub.s32 %s29, %s48
      %s80 = ssub.s32 %s30, %s44
      %s81 = sor.u32 %s79, %s80
      %s82 = ssub.s32 %s31, %s40
      %s83 = sor.u32 %s81, %s82
      %p84 = scmp.eq.s32.totalorder %s83, 0
      %s86 = sadd.s32 %s85, 1
      %s87 = scalar_select %p84, %s85, %s86
      %p90 = pneg %p84
      %p91 = scmp.eq.s32.totalorder %s22, 7
      %p92 = por %p90, %p91
      %p93 = scmp.ne.s32.totalorder %s85, %s88
      %p94 = scmp.eq.s32.totalorder %s22, 0
      %p95 = por %p93, %p94
      %p96 = scmp.ne.s32.totalorder %s85, %s88
      %p97 = scmp.eq.s32.totalorder %s27, 7
      %p98 = por %p96, %p97
      %p99 = scmp.ne.s32.totalorder %s88, %s89
      %p100 = scmp.eq.s32.totalorder %s27, 0
      %p101 = por %p99, %p100
      %p102 = scmp.ne.s32.totalorder %s88, %s89
      %p103 = scmp.eq.s32.totalorder %s28, 7
      %p104 = por %p102, %p103
      %p106 = scmp.ne.s32.totalorder %s89, %s105
      %p107 = scmp.eq.s32.totalorder %s28, 0
      %p108 = por %p106, %p107
      %p109 = scmp.le.s32.totalorder 1, %s22
      %p110 = scmp.lt.s32.totalorder %s22, 9
      %p111 = pnand %p109, %p110
      %p112 = pneg %p111
      // Predicated region
      $region9: #{tpu_custom_call.1} parent=5 // pred_check
        _
      $region10: #{tpu_custom_call.1} parent=5 // pred_check_branch
        %114 = sbr.rel (%p111) target = $region12
      $region11: #{tpu_custom_call.1} parent=5 // pred_region
        %s115 = ssub.s32 %s22, 1
      $region12: #{tpu_custom_call.1} parent=5 // pred_fallthru
        _
      %p116 = scmp.lt.s32.totalorder %s22, 8
      // Predicated region
      $region13: #{tpu_custom_call.1} parent=5 // pred_check
        %p117 = pneg %p116
      $region14: #{tpu_custom_call.1} parent=5 // pred_check_branch
        %119 = sbr.rel (%p117) target = $region16
      $region15: #{tpu_custom_call.1} parent=5 // pred_region
        // Predicated region
        $region17: #{tpu_custom_call.1} parent=15 // pred_check
          %p120 = pneg %p65
        $region18: #{tpu_custom_call.1} parent=15 // pred_check_branch
          %122 = sbr.rel (%p120) target = $region20
        $region19: #{tpu_custom_call.1} parent=15 // pred_region
          %s123 = sand.u32 %s55, 1
          %s124 = scalar_lea.sflag [#allocation5], %s123
          %s125 = sand.u32 %s55, 1
          %s126 = smul.addr %s125, 6
          %s127 = scalar_lea.vmem [#allocation4], %s126
          %129 = vsyncadd %s124, 0
          %s130 = smul.addr %s30, 3
          %s131 = sadd.s32 %s31, %s130
          %s132 = smul.addr %s29, 12
          %s133 = sadd.s32 %s131, %s132
          %s134 = smul.addr %s133, 2
          %s135 = scalar_lea.hbm %s1, %s134
          %s136 = sshll.u32 %s135, 4
          %s137 = int_to_ptr.hbm [resolvable:$true] %s136
          %s138 = sshll.u32 %s127, 4
          %s139 = int_to_ptr.vmem [resolvable:$true] %s138
          %144 = dma.hbm_to_vmem [thread:$0]  %s137, 96, %s139, %s124, 32, 32, 2
        $region20: #{tpu_custom_call.1} parent=15 // pred_fallthru
          _
      $region16: #{tpu_custom_call.1} parent=5 // pred_fallthru
        _
      %p145 = scmp.le.s32.totalorder 1, %s22
      %p146 = scmp.lt.s32.totalorder %s22, 9
      %p147 = pnand %p145, %p146
      %p148 = pneg %p147
      // Predicated region
      $region21: #{tpu_custom_call.1} parent=5 // pred_check
        _
      $region22: #{tpu_custom_call.1} parent=5 // pred_check_branch
        %150 = sbr.rel (%p147) target = $region24
      $region23: #{tpu_custom_call.1} parent=5 // pred_region
        %s151 = ssub.s32 %s22, 1
        %s152 = sand.u32 %s58, 1
        %s153 = scalar_lea.sflag [#allocation5], %s152
        %s154 = sand.u32 %s58, 1
        %s155 = smul.addr %s154, 6
        %s156 = scalar_lea.vmem [#allocation4], %s155
        // Predicated region
        $region25: #{tpu_custom_call.1} parent=23 // pred_check
          %p157 = pneg %p71
        $region26: #{tpu_custom_call.1} parent=23 // pred_check_branch
          %159 = sbr.rel (%p157) target = $region28
        $region27: #{tpu_custom_call.1} parent=23 // pred_region
          %161 = dma.done %s153, 96
        $region28: #{tpu_custom_call.1} parent=23 // pred_fallthru
          _
        %s162 = sand.u32 %s58, 1
        %s163 = scalar_lea.sflag [#allocation5], %s162
        %s164 = sand.u32 %s58, 1
        %s165 = smul.addr %s164, 6
        %s166 = scalar_lea.vmem [#allocation4], %s165
        %p167 = pneg %p71
        %p168 = pneg %p68
        %p169 = pneg %p101
        %p170 = pneg %p98
        %s171 = sand.u32 %s88, 1
        %s172 = scalar_lea.sflag [#allocation6], %s171
        %s173 = sand.u32 %s88, 1
        %s174 = smul.addr %s173, 6
        %s175 = scalar_lea.vmem [#allocation7], %s174
        %s176 = smul.u32 %s33, 128
        %s177 = sld [smem:[#allocation3 + %s176]]
        %s178 = sadd.s32 %s176, 1
        %s179 = sld [smem:[#allocation3 + %s178]]
        %s180 = sadd.s32 %s176, 2
        %s181 = sld [smem:[#allocation3 + %s180]]
        %s182 = sadd.s32 %s176, 3
        %s183 = sld [smem:[#allocation3 + %s182]]
        %s184 = sadd.s32 %s176, 4
        %s185 = sld [smem:[#allocation3 + %s184]]
        %s186 = sadd.s32 %s176, 5
        %s187 = sld [smem:[#allocation3 + %s186]]
        %s188 = sadd.s32 %s176, 6
        %s189 = sld [smem:[#allocation3 + %s188]]
        %s190 = sadd.s32 %s176, 7
        %s191 = sld [smem:[#allocation3 + %s190]]
        %s192 = sadd.s32 %s176, 8
        %s193 = sld [smem:[#allocation3 + %s192]]
        %s194 = sadd.s32 %s176, 9
        %s195 = sld [smem:[#allocation3 + %s194]]
        %s196 = sadd.s32 %s176, 10
        %s197 = sld [smem:[#allocation3 + %s196]]
        %s198 = sadd.s32 %s176, 11
        %s199 = sld [smem:[#allocation3 + %s198]]
        %v200 = vld [vmem:[%s156] sm:$0x3]
        %s201 = scalar_lea.vmem %s156, 2 [#allocation4]
        %v202 = vld [vmem:[%s201] sm:$0x3]
        %s203 = scalar_lea.vmem %s156, 4 [#allocation4]
        %v204 = vld [vmem:[%s203] sm:$0x3]
        %v205 = vstv %s177
        %v206 = vmul.f32 %v205, %v200
        %v207 = vstv %s195
        %v208 = vadd.f32 %v207, %v206
        %v209 = vstv %s183
        %v210 = vmul.f32 %v209, %v202
        %v211 = vadd.f32 %v208, %v210
        %v212 = vstv %s189
        %v213 = vmul.f32 %v212, %v204
        %v214 = vadd.f32 %v211, %v213
        %215 = vst [vmem:[%s175] sm:$0x3] %v214
        %v216 = vstv %s179
        %v217 = vmul.f32 %v216, %v200
        %v218 = vstv %s197
        %v219 = vadd.f32 %v218, %v217
        %v220 = vstv %s185
        %v221 = vmul.f32 %v220, %v202
        %v222 = vadd.f32 %v219, %v221
        %v223 = vstv %s191
        %v224 = vmul.f32 %v223, %v204
        %v225 = vadd.f32 %v222, %v224
        %s226 = scalar_lea.vmem %s175, 2 [#allocation7]
        %227 = vst [vmem:[%s226] sm:$0x3] %v225
        %v228 = vstv %s181
        %v229 = vmul.f32 %v228, %v200
        %v230 = vstv %s199
        %v231 = vadd.f32 %v230, %v229
        %v232 = vstv %s187
        %v233 = vmul.f32 %v232, %v202
        %v234 = vadd.f32 %v231, %v233
        %v235 = vstv %s193
        %v236 = vmul.f32 %v235, %v204
        %v237 = vadd.f32 %v234, %v236
        %s238 = scalar_lea.vmem %s175, 4 [#allocation7]
        %239 = vst [vmem:[%s238] sm:$0x3] %v237
        %s240 = sand.u32 %s88, 1
        %s241 = scalar_lea.sflag [#allocation6], %s240
        %s242 = sand.u32 %s88, 1
        %s243 = smul.addr %s242, 6
        %s244 = scalar_lea.vmem [#allocation7], %s243
        // Predicated region
        $region29: #{tpu_custom_call.1} parent=23 // pred_check
          %p245 = pneg %p98
        $region30: #{tpu_custom_call.1} parent=23 // pred_check_branch
          %247 = sbr.rel (%p245) target = $region32
        $region31: #{tpu_custom_call.1} parent=23 // pred_region
          %249 = vsyncadd %s241, 0
          %s250 = smul.addr %s33, 3
          %s251 = sadd.s32 %s34, %s250
          %s252 = smul.addr %s32, 12
          %s253 = sadd.s32 %s251, %s252
          %s254 = smul.addr %s253, 2
          %s255 = scalar_lea.hbm %s2, %s254
          %s256 = sshll.u32 %s244, 4
          %s257 = int_to_ptr.vmem [resolvable:$true] %s256
          %s258 = sshll.u32 %s255, 4
          %s259 = int_to_ptr.hbm [resolvable:$true] %s258
          %264 = dma.vmem_to_hbm [thread:$0]  %s257, 96, %s259, %s241, 32, 32, 2
        $region32: #{tpu_custom_call.1} parent=23 // pred_fallthru
          _
      $region24: #{tpu_custom_call.1} parent=5 // pred_fallthru
        _
      %p265 = scmp.le.s32.totalorder 2, %s22
      // Predicated region
      $region33: #{tpu_custom_call.1} parent=5 // pred_check
        %p266 = pneg %p265
      $region34: #{tpu_custom_call.1} parent=5 // pred_check_branch
        %268 = sbr.rel (%p266) target = $region36
      $region35: #{tpu_custom_call.1} parent=5 // pred_region
        %s269 = ssub.s32 %s22, 2
        // Predicated region
        $region37: #{tpu_custom_call.1} parent=35 // pred_check
          %p270 = pneg %p104
        $region38: #{tpu_custom_call.1} parent=35 // pred_check_branch
          %272 = sbr.rel (%p270) target = $region40
        $region39: #{tpu_custom_call.1} parent=35 // pred_region
          %s273 = sand.u32 %s89, 1
          %s274 = scalar_lea.sflag [#allocation6], %s273
          %s275 = sand.u32 %s89, 1
          %s276 = smul.addr %s275, 6
          %s277 = scalar_lea.vmem [#allocation7], %s276
          %279 = dma.done %s274, 96
        $region40: #{tpu_custom_call.1} parent=35 // pred_fallthru
          _
      $region36: #{tpu_custom_call.1} parent=5 // pred_fallthru
        _
    $region6: #{tpu_custom_call.1} parent=1 // loop_footer
      %s26 = sadd.s32 1, %s22
    $region7: #{tpu_custom_call.1} parent=1 // loop_footer_branch
      %21 = sbr.rel target = $region3
    $region8: #{tpu_custom_call.1} parent=1 // loop_exit
      _
    %280 = vsyncpa [#allocation5], 1
    %s281 = scalar_lea.sflag [#allocation5], 1
    %282 = vsyncpa %s281, 1
    %283 = vsyncpa [#allocation6], 1
    %s284 = scalar_lea.sflag [#allocation6], 1
    %285 = vsyncpa %s284, 1

</llo_original>
